<compile_context>
chip_gen: v6e
topology: v6e:2x2x1
jax: 0.10.0
libtpu: 0.0.40
codegen_flags: <defaults>
</compile_context>

<pallas_src>
import jax
import jax.numpy as jnp
from jax.experimental import pallas as pl
from jax.experimental.pallas import tpu as pltpu

PAD_ID = 1  # attention mask = (ids != 1), exactly as in the PyTorch module


# --------------------------------------------------------------------------
# Kernel
# --------------------------------------------------------------------------
def bt_head_kernel(temb_ref, tmask_ref, cemb_ref, cmask_ref,
                   tcnt_ref, ccnt_ref,
                   w_t_ref, w_c_ref, b_ref,
                   prob_ref,
                   tsum_acc, csum_acc):
    si = pl.program_id(1)

    @pl.when(si == 0)
    def _init():
        tsum_acc[...] = jnp.zeros_like(tsum_acc)
        csum_acc[...] = jnp.zeros_like(csum_acc)

    # Masked sum over this seq tile on the MXU, natural (B, S, H) layout:
    # (TB,1,TS) bf16  x  (TB,TS,H) bf16  ->  (TB,1,H) f32 (accumulated).
    tpart = jnp.einsum("bqs,bsh->bqh", tmask_ref[...], temb_ref[...],
                       preferred_element_type=jnp.float32)
    cpart = jnp.einsum("bqs,bsh->bqh", cmask_ref[...], cemb_ref[...],
                       preferred_element_type=jnp.float32)
    tsum_acc[...] += tpart[:, 0, :]
    csum_acc[...] += cpart[:, 0, :]

    @pl.when(si == pl.num_programs(1) - 1)
    def _finalize():
        # masked mean + tanh (stand-in encoders' pooled output); counts were
        # precomputed in the wrapper -> no per-step cross-lane reduce here.
        tpool = jnp.tanh(tsum_acc[...] / jnp.maximum(tcnt_ref[...], 1.0))
        cpool = jnp.tanh(csum_acc[...] / jnp.maximum(ccnt_ref[...], 1.0))
        # fc -> fc1 -> fc2 collapsed into W_t / W_c / b (pre-fused once);
        # concat([text, code]) @ W  ==  text @ W_t + code @ W_c.
        logits = (jnp.dot(tpool, w_t_ref[...], preferred_element_type=jnp.float32)
                  + jnp.dot(cpool, w_c_ref[...], preferred_element_type=jnp.float32)
                  + b_ref[...])                              # (TB, NPAD)
        m = jnp.max(logits, axis=-1, keepdims=True)
        e = jnp.exp(logits - m)                              # padded cols -> exactly 0
        prob_ref[...] = e / jnp.sum(e, axis=-1, keepdims=True)


# --------------------------------------------------------------------------
# Helpers
# --------------------------------------------------------------------------
def _round_up(x, m):
    return ((x + m - 1) // m) * m


def _block_bytes(shape, dtype):
    """VMEM footprint estimate (minor two dims rounded up to (8, 128))."""
    pad = list(int(d) for d in shape)
    if len(pad) >= 2:
        pad[-2] = _round_up(pad[-2], 8)
    pad[-1] = _round_up(pad[-1], 128)
    n = 1
    for d in pad:
        n *= d
    return n * jnp.dtype(dtype).itemsize


def fuse_head_params(params):
    """Collapse fc -> fc1 -> fc2 (no nonlinearity between them) into one
    (H, C)-matmul per encoder half plus a single bias, and pad the class dim
    to a lane-dense multiple of 128.  Call ONCE and reuse across forwards."""
    w12 = params["w_fc1"] @ params["w_fc2"]                  # (mid1, C)
    w_t = params["w_fc_t"] @ w12                             # (Ht, C)
    w_c = params["w_fc_c"] @ w12                             # (Hc, C)
    bias = (params["b_fc"] @ w12
            + params["b_fc1"] @ params["w_fc2"]
            + params["b_fc2"])                               # (1, C)
    num_class = bias.shape[-1]
    npad = _round_up(max(num_class, 1), 128)
    w_t = jnp.pad(w_t, ((0, 0), (0, npad - num_class))).astype(jnp.float32)
    w_c = jnp.pad(w_c, ((0, 0), (0, npad - num_class))).astype(jnp.float32)
    bias = jnp.pad(bias, ((0, 0), (0, npad - num_class)),
                   constant_values=-1e30).astype(jnp.float32)
    return {"w_t": w_t, "w_c": w_c, "bias": bias, "num_class": num_class}


# --------------------------------------------------------------------------
# Forward wrapper
# --------------------------------------------------------------------------
def bt_model_forward(text_input_ids, code_input_ids, params, *, fused=None,
                     batch_tile=16, max_seq_tile=256):
    """labels=None path of BTModel.forward -> softmax probabilities (B, num_class)."""
    B, S = text_input_ids.shape
    text_table = params["text_embed"]                        # (V, Ht) bf16
    code_table = params["code_embed"]                        # (V, Hc) bf16
    Ht = text_table.shape[-1]
    Hc = code_table.shape[-1]

    if fused is None:                                        # hoist & cache when possible
        fused = fuse_head_params(params)
    w_t, w_c, bias = fused["w_t"], fused["w_c"], fused["bias"]
    num_class = fused["num_class"]
    NPAD = w_t.shape[-1]

    # ---- tiling ------------------------------------------------------------
    # Batch tile: sublane-multiple, capped by the (padded) batch; prefer >=2
    # blocks along the "parallel" axis so v7x's 2 TensorCores both get work.
    TB = max(8, min(_round_up(batch_tile, 8), _round_up(B, 8)))
    if _round_up(B, 8) // TB < 2 and _round_up(B, 8) >= 16:
        TB = _round_up(_round_up(B, 8) // 2, 8)
    B_pad = _round_up(B, TB)

    # Seq tile: full seq when small, otherwise a 128-multiple chunk so the
    # bf16 emb blocks (2 encoders x 2 pipeline buffers) stay inside v7x VMEM.
    if S <= max_seq_tile:
        TS, S_pad = S, S
    else:
        TS = max_seq_tile                                    # multiple of 128
        S_pad = _round_up(S, TS)

    # ---- inputs (natural (B, S, H) layout — no transpose copy) -------------
    def prep(ids, table):
        ids_p = jnp.pad(ids, ((0, B_pad - B), (0, S_pad - S)),
                        constant_values=PAD_ID)
        # TODO(synk): gather still runs in XLA; fusing it via scalar-prefetched
        # ids + in-kernel DMA gather would remove this HBM round trip.
        emb = jnp.take(table, ids_p, axis=0)                 # (Bp, Sp, H) bf16
        valid = (ids_p != PAD_ID)
        mask = valid.astype(jnp.bfloat16)[:, None, :]        # (Bp, 1, Sp) bf16
        cnt = jnp.sum(valid, axis=1, dtype=jnp.float32)[:, None]   # (Bp, 1) f32
        return emb, mask, cnt

    temb, tmask, tcnt = prep(text_input_ids, text_table)
    cemb, cmask, ccnt = prep(code_input_ids, code_table)

    grid = (B_pad // TB, S_pad // TS)

    grid_spec = pltpu.PrefetchScalarGridSpec(
        num_scalar_prefetch=0,
        grid=grid,
        in_specs=[
            pl.BlockSpec((TB, TS, Ht), lambda bi, si: (bi, si, 0)),   # text emb
            pl.BlockSpec((TB, 1, TS), lambda bi, si: (bi, 0, si)),    # text mask (bf16)
            pl.BlockSpec((TB, TS, Hc), lambda bi, si: (bi, si, 0)),   # code emb
            pl.BlockSpec((TB, 1, TS), lambda bi, si: (bi, 0, si)),    # code mask (bf16)
            pl.BlockSpec((TB, 1), lambda bi, si: (bi, 0)),            # text token counts
            pl.BlockSpec((TB, 1), lambda bi, si: (bi, 0)),            # code token counts
            pl.BlockSpec((Ht, NPAD), lambda bi, si: (0, 0)),          # fused W_t
            pl.BlockSpec((Hc, NPAD), lambda bi, si: (0, 0)),          # fused W_c
            pl.BlockSpec((1, NPAD), lambda bi, si: (0, 0)),           # fused bias
        ],
        out_specs=pl.BlockSpec((TB, NPAD), lambda bi, si: (bi, 0)),
        scratch_shapes=[
            pltpu.VMEM((TB, Ht), jnp.float32),   # text pooled-sum accumulator
            pltpu.VMEM((TB, Hc), jnp.float32),   # code pooled-sum accumulator
        ],
    )

    # ---- VMEM budget: actual double-buffered blocks + scratch, 2x headroom,
    # clamped to [32 MiB, 96 MiB] (big tiles on v5e/v6e, within v7x's 64 MiB
    # for the tile sizes chosen above). -------------------------------------
    need = (2 * (_block_bytes((TB, TS, Ht), jnp.bfloat16)
                 + _block_bytes((TB, TS, Hc), jnp.bfloat16)
                 + 2 * _block_bytes((TB, 1, TS), jnp.bfloat16)
                 + 2 * _block_bytes((TB, 1), jnp.float32)
                 + _block_bytes((Ht, NPAD), jnp.float32)
                 + _block_bytes((Hc, NPAD), jnp.float32)
                 + _block_bytes((1, NPAD), jnp.float32)
                 + _block_bytes((TB, NPAD), jnp.float32))
            + _block_bytes((TB, Ht), jnp.float32)
            + _block_bytes((TB, Hc), jnp.float32))
    vmem_limit = int(min(max(2 * need, 32 * 1024 * 1024), 96 * 1024 * 1024))

    prob_pad = pl.pallas_call(
        bt_head_kernel,
        out_shape=jax.ShapeDtypeStruct((B_pad, NPAD), jnp.float32),
        grid_spec=grid_spec,
        compiler_params=pltpu.CompilerParams(
            dimension_semantics=("parallel", "arbitrary"),
            vmem_limit_bytes=vmem_limit,
        ),
    )(temb, tmask, cemb, cmask, tcnt, ccnt, w_t, w_c, bias)

    return prob_pad[:B, :num_class]


# --------------------------------------------------------------------------
# Pure-JAX reference (un-collapsed 3-matmul chain) and parameter init
# --------------------------------------------------------------------------
def bt_model_reference(text_ids, code_ids, params):
    def pool(ids, table):
        emb = jnp.take(table, ids, axis=0).astype(jnp.float32)
        mask = (ids != PAD_ID).astype(jnp.float32)
        s = jnp.sum(emb * mask[:, :, None], axis=1)
        c = jnp.maximum(jnp.sum(mask, axis=1, keepdims=True), 1.0)
        return jnp.tanh(s / c)

    tp = pool(text_ids, params["text_embed"])
    cp = pool(code_ids, params["code_embed"])
    w_fc = jnp.concatenate([params["w_fc_t"], params["w_fc_c"]], axis=0)
    h = jnp.concatenate([tp, cp], axis=-1) @ w_fc + params["b_fc"]
    h = h @ params["w_fc1"] + params["b_fc1"]
    logits = h @ params["w_fc2"] + params["b_fc2"]
    return jax.nn.softmax(logits, axis=-1)


def init_params(key, vocab, text_hidden, code_hidden, num_class):
    combined = text_hidden + code_hidden
    mid1 = combined // 2
    mid2 = combined // 4
    ks = jax.random.split(key, 8)
    scale = 0.02
    return {
        # stand-in encoder embedding tables (streamed as bf16)
        "text_embed": (scale * jax.random.normal(ks[0], (vocab, text_hidden), jnp.float32)
                       + 0.1).astype(jnp.bfloat16),
        "code_embed": (scale * jax.random.normal(ks[1], (vocab, code_hidden), jnp.float32)
                       + 0.1).astype(jnp.bfloat16),
        # fc: (text_hidden + code_hidden) -> mid1, split along input dim
        "w_fc_t": scale * jax.random.normal(ks[2], (text_hidden, mid1), jnp.float32),
        "w_fc_c": scale * jax.random.normal(ks[3], (code_hidden, mid1), jnp.float32),
        "b_fc":   scale * jax.random.normal(ks[4], (1, mid1), jnp.float32),
        # fc1: mid1 -> mid2
        "w_fc1":  scale * jax.random.normal(ks[5], (mid1, mid2), jnp.float32),
        "b_fc1":  jnp.zeros((1, mid2), jnp.float32),
        # fc2: mid2 -> num_class
        "w_fc2":  scale * jax.random.normal(ks[6], (mid2, num_class), jnp.float32),
        "b_fc2":  scale * jax.random.normal(ks[7], (1, num_class), jnp.float32),
    }


if __name__ == "__main__":
    B, S = 2, 8
    VOCAB = 50
    TEXT_HIDDEN, CODE_HIDDEN, NUM_CLASS = 32, 32, 4

    key = jax.random.PRNGKey(0)
    k_param, k_text, k_code = jax.random.split(key, 3)
    params = init_params(k_param, VOCAB, TEXT_HIDDEN, CODE_HIDDEN, NUM_CLASS)

    # token id 1 acts as the pad token (mask = ids != 1, as in the PyTorch code)
    text_input_ids = jax.random.randint(k_text, (B, S), 0, VOCAB, dtype=jnp.int32)
    code_input_ids = jax.random.randint(k_code, (B, S), 0, VOCAB, dtype=jnp.int32)
    text_input_ids = text_input_ids.at[:, -2:].set(1)   # some padding
    code_input_ids = code_input_ids.at[:, -1:].set(1)

    fused = fuse_head_params(params)                     # hoisted: computed once
    prob = bt_model_forward(text_input_ids, code_input_ids, params, fused=fused)
    prob = jax.block_until_ready(prob)

    assert prob.shape == (B, NUM_CLASS)
    row_sums = jnp.sum(prob, axis=-1)
    assert bool(jnp.all(jnp.abs(row_sums - 1.0) < 1e-5))

    ref = bt_model_reference(text_input_ids, code_input_ids, params)
    assert float(jnp.max(jnp.abs(prob - ref))) < 1e-3

    print("KERNEL_OK")
</pallas_src>

<mosaic_0001>
module attributes {stable_mosaic.version = 11 : i64} {
  func.func @bt_head_kernel(%arg0: i32, %arg1: i32, %arg2: memref<8x8x32xbf16, #tpu.memory_space<vmem>>, %arg3: memref<8x1x8xbf16, #tpu.memory_space<vmem>>, %arg4: memref<8x8x32xbf16, #tpu.memory_space<vmem>>, %arg5: memref<8x1x8xbf16, #tpu.memory_space<vmem>>, %arg6: memref<8x1xf32, #tpu.memory_space<vmem>>, %arg7: memref<8x1xf32, #tpu.memory_space<vmem>>, %arg8: memref<32x128xf32, #tpu.memory_space<vmem>>, %arg9: memref<32x128xf32, #tpu.memory_space<vmem>>, %arg10: memref<1x128xf32, #tpu.memory_space<vmem>>, %arg11: memref<8x128xf32, #tpu.memory_space<vmem>>, %arg12: memref<8x32xf32, #tpu.memory_space<vmem>>, %arg13: memref<8x32xf32, #tpu.memory_space<vmem>>) attributes {dimension_semantics = [#tpu.dimension_semantics<parallel>, #tpu.dimension_semantics<arbitrary>], iteration_bounds = array<i64: 1, 1>, scalar_prefetch = 0 : i64, scratch_operands = 2 : i64, tpu.core_type = #tpu.core_type<tc>, window_params = [{transform_indices = @transform_0, window_bounds = array<i64: 8, 8, 32>}, {transform_indices = @transform_1, window_bounds = array<i64: 8, 1, 8>}, {transform_indices = @transform_2, window_bounds = array<i64: 8, 8, 32>}, {transform_indices = @transform_3, window_bounds = array<i64: 8, 1, 8>}, {transform_indices = @transform_4, window_bounds = array<i64: 8, 1>}, {transform_indices = @transform_5, window_bounds = array<i64: 8, 1>}, {pipeline_mode = #tpu.pipeline_mode<synchronous>, transform_indices = @transform_6, window_bounds = array<i64: 32, 128>}, {pipeline_mode = #tpu.pipeline_mode<synchronous>, transform_indices = @transform_7, window_bounds = array<i64: 32, 128>}, {pipeline_mode = #tpu.pipeline_mode<synchronous>, transform_indices = @transform_8, window_bounds = array<i64: 1, 128>}, {transform_indices = @transform_9, window_bounds = array<i64: 8, 128>}]} {
    %c0_i32 = arith.constant 0 : i32
    %0 = arith.cmpi eq, %arg1, %c0_i32 : i32
    %1 = arith.extui %0 : i1 to i32
    %c0_i32_0 = arith.constant 0 : i32
    %2 = arith.cmpi ne, %1, %c0_i32_0 : i32
    scf.if %2 {
      %cst_23 = arith.constant 0.000000e+00 : f32
      %20 = vector.broadcast %cst_23 : f32 to vector<8x32xf32>
      %c0_24 = arith.constant 0 : index
      %c0_25 = arith.constant 0 : index
      %21 = vector.load %arg12[%c0_24, %c0_25] : memref<8x32xf32, #tpu.memory_space<vmem>>, vector<8x32xf32>
      tpu.vector_store %arg12[%c0_24, %c0_25], %20 {strides = array<i32>} : memref<8x32xf32, #tpu.memory_space<vmem>>, vector<8x32xf32>,
      %cst_26 = arith.constant 0.000000e+00 : f32
      %22 = vector.broadcast %cst_26 : f32 to vector<8x32xf32>
      %c0_27 = arith.constant 0 : index
      %c0_28 = arith.constant 0 : index
      %23 = vector.load %arg13[%c0_27, %c0_28] : memref<8x32xf32, #tpu.memory_space<vmem>>, vector<8x32xf32>
      tpu.vector_store %arg13[%c0_27, %c0_28], %22 {strides = array<i32>} : memref<8x32xf32, #tpu.memory_space<vmem>>, vector<8x32xf32>,
    } else {
    }
    %c0 = arith.constant 0 : index
    %c0_1 = arith.constant 0 : index
    %c0_2 = arith.constant 0 : index
    %3 = vector.load %arg3[%c0, %c0_1, %c0_2] : memref<8x1x8xbf16, #tpu.memory_space<vmem>>, vector<8x1x8xbf16>
    %c0_3 = arith.constant 0 : index
    %c0_4 = arith.constant 0 : index
    %c0_5 = arith.constant 0 : index
    %4 = vector.load %arg2[%c0_3, %c0_4, %c0_5] : memref<8x8x32xbf16, #tpu.memory_space<vmem>>, vector<8x8x32xbf16>
    "tpu.trace_start"() <{level = 10 : i32, message = "bqs,bsh->bqh"}> : () -> ()
    %cst = arith.constant dense<0.000000e+00> : vector<8x1x32xf32>
    %5 = tpu.matmul %3, %4, %cst {dimension_numbers = #tpu.dot_dimension_numbers<[2], [1], [1], [2], [0, 0, 0, 1, 1, 2], [0], [0]>} : vector<8x1x8xbf16>, vector<8x8x32xbf16>, vector<8x1x32xf32> -> vector<8x1x32xf32>
    "tpu.trace_stop"() : () -> ()
    %c0_6 = arith.constant 0 : index
    %c0_7 = arith.constant 0 : index
    %c0_8 = arith.constant 0 : index
    %6 = vector.load %arg5[%c0_6, %c0_7, %c0_8] : memref<8x1x8xbf16, #tpu.memory_space<vmem>>, vector<8x1x8xbf16>
    %c0_9 = arith.constant 0 : index
    %c0_10 = arith.constant 0 : index
    %c0_11 = arith.constant 0 : index
    %7 = vector.load %arg4[%c0_9, %c0_10, %c0_11] : memref<8x8x32xbf16, #tpu.memory_space<vmem>>, vector<8x8x32xbf16>
    "tpu.trace_start"() <{level = 10 : i32, message = "bqs,bsh->bqh"}> : () -> ()
    %cst_12 = arith.constant dense<0.000000e+00> : vector<8x1x32xf32>
    %8 = tpu.matmul %6, %7, %cst_12 {dimension_numbers = #tpu.dot_dimension_numbers<[2], [1], [1], [2], [0, 0, 0, 1, 1, 2], [0], [0]>} : vector<8x1x8xbf16>, vector<8x8x32xbf16>, vector<8x1x32xf32> -> vector<8x1x32xf32>
    "tpu.trace_stop"() : () -> ()
    %c0_13 = arith.constant 0 : index
    %c0_14 = arith.constant 0 : index
    %9 = vector.load %arg12[%c0_13, %c0_14] : memref<8x32xf32, #tpu.memory_space<vmem>>, vector<8x32xf32>
    %10 = vector.shape_cast %5 : vector<8x1x32xf32> to vector<8x32xf32>
    %11 = arith.addf %9, %10 : vector<8x32xf32>
    %c0_15 = arith.constant 0 : index
    %c0_16 = arith.constant 0 : index
    %12 = vector.load %arg12[%c0_15, %c0_16] : memref<8x32xf32, #tpu.memory_space<vmem>>, vector<8x32xf32>
    tpu.vector_store %arg12[%c0_15, %c0_16], %11 {strides = array<i32>} : memref<8x32xf32, #tpu.memory_space<vmem>>, vector<8x32xf32>,
    %c0_17 = arith.constant 0 : index
    %c0_18 = arith.constant 0 : index
    %13 = vector.load %arg13[%c0_17, %c0_18] : memref<8x32xf32, #tpu.memory_space<vmem>>, vector<8x32xf32>
    %14 = vector.shape_cast %8 : vector<8x1x32xf32> to vector<8x32xf32>
    %15 = arith.addf %13, %14 : vector<8x32xf32>
    %c0_19 = arith.constant 0 : index
    %c0_20 = arith.constant 0 : index
    %16 = vector.load %arg13[%c0_19, %c0_20] : memref<8x32xf32, #tpu.memory_space<vmem>>, vector<8x32xf32>
    tpu.vector_store %arg13[%c0_19, %c0_20], %15 {strides = array<i32>} : memref<8x32xf32, #tpu.memory_space<vmem>>, vector<8x32xf32>,
    %c0_i32_21 = arith.constant 0 : i32
    %17 = arith.cmpi eq, %arg1, %c0_i32_21 : i32
    %18 = arith.extui %17 : i1 to i32
    %c0_i32_22 = arith.constant 0 : i32
    %19 = arith.cmpi ne, %18, %c0_i32_22 : i32
    scf.if %19 {
      %c0_23 = arith.constant 0 : index
      %c0_24 = arith.constant 0 : index
      %20 = vector.load %arg12[%c0_23, %c0_24] : memref<8x32xf32, #tpu.memory_space<vmem>>, vector<8x32xf32>
      %c0_25 = arith.constant 0 : index
      %c0_26 = arith.constant 0 : index
      %21 = vector.load %arg6[%c0_25, %c0_26] : memref<8x1xf32, #tpu.memory_space<vmem>>, vector<8x1xf32>
      %cst_27 = arith.constant 1.000000e+00 : f32
      %22 = vector.broadcast %cst_27 : f32 to vector<8x1xf32>
      %23 = arith.maximumf %21, %22 : vector<8x1xf32>
      %24 = vector.broadcast %23 : vector<8x1xf32> to vector<8x32xf32>
      %25 = arith.divf %20, %24 : vector<8x32xf32>
      %26 = math.tanh %25 : vector<8x32xf32>
      %c0_28 = arith.constant 0 : index
      %c0_29 = arith.constant 0 : index
      %27 = vector.load %arg13[%c0_28, %c0_29] : memref<8x32xf32, #tpu.memory_space<vmem>>, vector<8x32xf32>
      %c0_30 = arith.constant 0 : index
      %c0_31 = arith.constant 0 : index
      %28 = vector.load %arg7[%c0_30, %c0_31] : memref<8x1xf32, #tpu.memory_space<vmem>>, vector<8x1xf32>
      %cst_32 = arith.constant 1.000000e+00 : f32
      %29 = vector.broadcast %cst_32 : f32 to vector<8x1xf32>
      %30 = arith.maximumf %28, %29 : vector<8x1xf32>
      %31 = vector.broadcast %30 : vector<8x1xf32> to vector<8x32xf32>
      %32 = arith.divf %27, %31 : vector<8x32xf32>
      %33 = math.tanh %32 : vector<8x32xf32>
      %c0_33 = arith.constant 0 : index
      %c0_34 = arith.constant 0 : index
      %34 = vector.load %arg8[%c0_33, %c0_34] : memref<32x128xf32, #tpu.memory_space<vmem>>, vector<32x128xf32>
      %cst_35 = arith.constant dense<0.000000e+00> : vector<8x128xf32>
      %35 = tpu.matmul %26, %34, %cst_35 {dimension_numbers = #tpu.dot_dimension_numbers<[1], [0], [0], [1], [0, 0, 1, 1], [], []>} : vector<8x32xf32>, vector<32x128xf32>, vector<8x128xf32> -> vector<8x128xf32>
      %c0_36 = arith.constant 0 : index
      %c0_37 = arith.constant 0 : index
      %36 = vector.load %arg9[%c0_36, %c0_37] : memref<32x128xf32, #tpu.memory_space<vmem>>, vector<32x128xf32>
      %cst_38 = arith.constant dense<0.000000e+00> : vector<8x128xf32>
      %37 = tpu.matmul %33, %36, %cst_38 {dimension_numbers = #tpu.dot_dimension_numbers<[1], [0], [0], [1], [0, 0, 1, 1], [], []>} : vector<8x32xf32>, vector<32x128xf32>, vector<8x128xf32> -> vector<8x128xf32>
      %38 = arith.addf %35, %37 : vector<8x128xf32>
      %c0_39 = arith.constant 0 : index
      %c0_40 = arith.constant 0 : index
      %39 = vector.load %arg10[%c0_39, %c0_40] : memref<1x128xf32, #tpu.memory_space<vmem>>, vector<1x128xf32>
      %40 = vector.broadcast %39 : vector<1x128xf32> to vector<8x128xf32>
      %41 = arith.addf %38, %40 : vector<8x128xf32>
      %cst_41 = arith.constant dense<0xFF800000> : vector<8xf32>
      %42 = vector.multi_reduction <maximumf>, %41, %cst_41 [1] : vector<8x128xf32> to vector<8xf32>
      %43 = vector.shape_cast %42 : vector<8xf32> to vector<8x1xf32>
      %44 = vector.broadcast %43 : vector<8x1xf32> to vector<8x128xf32>
      %45 = arith.subf %41, %44 : vector<8x128xf32>
      %46 = math.exp %45 : vector<8x128xf32>
      %cst_42 = arith.constant dense<0.000000e+00> : vector<8xf32>
      %47 = vector.multi_reduction <add>, %46, %cst_42 [1] : vector<8x128xf32> to vector<8xf32>
      %48 = vector.shape_cast %47 : vector<8xf32> to vector<8x1xf32>
      %49 = vector.broadcast %48 : vector<8x1xf32> to vector<8x128xf32>
      %50 = arith.divf %46, %49 : vector<8x128xf32>
      %c0_43 = arith.constant 0 : index
      %c0_44 = arith.constant 0 : index
      %51 = vector.load %arg11[%c0_43, %c0_44] : memref<8x128xf32, #tpu.memory_space<vmem>>, vector<8x128xf32>
      tpu.vector_store %arg11[%c0_43, %c0_44], %50 {strides = array<i32>} : memref<8x128xf32, #tpu.memory_space<vmem>>, vector<8x128xf32>,
    } else {
    }
    return
  }
  func.func @transform_0(%arg0: i32, %arg1: i32) -> (i32, i32, i32) {
    %c0_i32 = arith.constant 0 : i32
    %c0_i32_0 = arith.constant 0 : i32
    return %arg0, %arg1, %c0_i32 : i32, i32, i32
  }
  func.func @transform_1(%arg0: i32, %arg1: i32) -> (i32, i32, i32) {
    %c0_i32 = arith.constant 0 : i32
    %c0_i32_0 = arith.constant 0 : i32
    return %arg0, %c0_i32, %arg1 : i32, i32, i32
  }
  func.func @transform_2(%arg0: i32, %arg1: i32) -> (i32, i32, i32) {
    %c0_i32 = arith.constant 0 : i32
    %c0_i32_0 = arith.constant 0 : i32
    return %arg0, %arg1, %c0_i32 : i32, i32, i32
  }
  func.func @transform_3(%arg0: i32, %arg1: i32) -> (i32, i32, i32) {
    %c0_i32 = arith.constant 0 : i32
    %c0_i32_0 = arith.constant 0 : i32
    return %arg0, %c0_i32, %arg1 : i32, i32, i32
  }
  func.func @transform_4(%arg0: i32, %arg1: i32) -> (i32, i32) {
    %c0_i32 = arith.constant 0 : i32
    %c0_i32_0 = arith.constant 0 : i32
    return %arg0, %c0_i32 : i32, i32
  }
  func.func @transform_5(%arg0: i32, %arg1: i32) -> (i32, i32) {
    %c0_i32 = arith.constant 0 : i32
    %c0_i32_0 = arith.constant 0 : i32
    return %arg0, %c0_i32 : i32, i32
  }
  func.func @transform_6(%arg0: i32, %arg1: i32) -> (i32, i32) {
    %c0_i32 = arith.constant 0 : i32
    %c0_i32_0 = arith.constant 0 : i32
    %c0_i32_1 = arith.constant 0 : i32
    return %c0_i32, %c0_i32_0 : i32, i32
  }
  func.func @transform_7(%arg0: i32, %arg1: i32) -> (i32, i32) {
    %c0_i32 = arith.constant 0 : i32
    %c0_i32_0 = arith.constant 0 : i32
    %c0_i32_1 = arith.constant 0 : i32
    return %c0_i32, %c0_i32_0 : i32, i32
  }
  func.func @transform_8(%arg0: i32, %arg1: i32) -> (i32, i32) {
    %c0_i32 = arith.constant 0 : i32
    %c0_i32_0 = arith.constant 0 : i32
    %c0_i32_1 = arith.constant 0 : i32
    return %c0_i32, %c0_i32_0 : i32, i32
  }
  func.func @transform_9(%arg0: i32, %arg1: i32) -> (i32, i32) {
    %c0_i32 = arith.constant 0 : i32
    %c0_i32_0 = arith.constant 0 : i32
    return %arg0, %c0_i32 : i32, i32
  }
}

</mosaic_0001>

<llo_original>
// kernel: tpu_custom_call.1
$region0: #{tpu_custom_call.1}
  #allocation0 [shape = 'u32[]', space=smem, size = 0x4, offset = 0x4, fixed_abs, tag = 'smem constant byte address 0x4 - core index']
  #allocation1 [shape = 'u32[144,128]{1,0:T(1,128)}', space=vmem, size = 0x12000, scoped, tag = 'internal scratch']
  #allocation2 [shape = 'f32[8,32]{1,0:T(8,128)}', space=vmem, size = 0x1000, scoped, tag = 'scratch operand']
  #allocation3 [shape = 'f32[8,32]{1,0:T(8,128)}', space=vmem, size = 0x1000, scoped, tag = 'scratch operand']
  %s0 = inlined_call_operand.vmem [shape: bf16[8,8,32], index: 0, kind: input, shape index: {}]
  %s1 = inlined_call_operand.vmem [shape: bf16[8,1,8], index: 1, kind: input, shape index: {}]
  %s2 = inlined_call_operand.hbm [shape: bf16[8,8,32], index: 2, kind: input, shape index: {}]
  %s3 = inlined_call_operand.vmem [shape: bf16[8,1,8], index: 3, kind: input, shape index: {}]
  %s4 = inlined_call_operand.vmem [shape: f32[8,1], index: 4, kind: input, shape index: {}]
  %s5 = inlined_call_operand.vmem [shape: f32[8,1], index: 5, kind: input, shape index: {}]
  %s6 = inlined_call_operand.hbm [shape: f32[32,128], index: 6, kind: input, shape index: {}]
  %s7 = inlined_call_operand.hbm [shape: f32[32,128], index: 7, kind: input, shape index: {}]
  %s8 = inlined_call_operand.vmem [shape: f32[1,128], index: 8, kind: input, shape index: {}]
  %s9 = inlined_call_operand.hbm [shape: f32[8,128], index: 9, kind: output, shape index: {}]
  %s10 = sld [smem:[#allocation0]]
  $region66: #{tpu_custom_call.1} parent=0
    _
  %s12 = ssub.s32 1, %s10
  %s13 = scalar_select 0, %s12, %s10
  $region1: #{tpu_custom_call.1} parent=0
    #allocation4 [shape = 'u8[16384]{0}', space=vmem, size = 0x4000, scoped, tag = 'input window, operand 2, single buffered']
    #allocation5 [shape = 's32[1]{0}', space=sflag, size = 0x4, scoped, tag = 'scoped memory for tpu_custom_call.1']
    #allocation6 [shape = 's32[1]{0}', space=sflag, size = 0x4, scoped, tag = 'scoped memory for tpu_custom_call.1']
    #allocation7 [shape = 'u8[16384]{0}', space=vmem, size = 0x4000, scoped, tag = 'input window, operand 6, single buffered']
    #allocation8 [shape = 's32[1]{0}', space=sflag, size = 0x4, scoped, tag = 'scoped memory for tpu_custom_call.1']
    #allocation9 [shape = 'u8[16384]{0}', space=vmem, size = 0x4000, scoped, tag = 'input window, operand 7, single buffered']
    #allocation10 [shape = 'u8[4096]{0}', space=vmem, size = 0x1000, scoped, tag = 'output window, operand 0, single buffered']
    %14 = vsyncpa [#allocation5], 0
    %15 = vsyncpa [#allocation8], 0
    %16 = vsyncpa [#allocation6], 0
    // Predicated region
    $region2: #{tpu_custom_call.1} parent=1 // pred_check
      _
    $region3: #{tpu_custom_call.1} parent=1 // pred_check_branch
      %18 = sbr.rel (0) target = $region5
    $region4: #{tpu_custom_call.1} parent=1 // pred_region
      _
    $region5: #{tpu_custom_call.1} parent=1 // pred_fallthru
      _
    // Predicated region
    $region6: #{tpu_custom_call.1} parent=1 // pred_check
      _
    $region7: #{tpu_custom_call.1} parent=1 // pred_check_branch
      %20 = sbr.rel (0) target = $region9
    $region8: #{tpu_custom_call.1} parent=1 // pred_region
      _
    $region9: #{tpu_custom_call.1} parent=1 // pred_fallthru
      _
    // Predicated region
    $region10: #{tpu_custom_call.1} parent=1 // pred_check
      _
    $region11: #{tpu_custom_call.1} parent=1 // pred_check_branch
      %22 = sbr.rel (0) target = $region13
    $region12: #{tpu_custom_call.1} parent=1 // pred_region
      %s24 = ssub.s32 512, 512
      %25 = vsyncadd [#allocation5], %s24
      %s26 = sshll.u32 [#allocation4], 4
      %s27 = int_to_ptr.vmem [resolvable:$true] %s26
      %32 = dma.hbm_to_vmem [thread:$0]  %s2, 512, %s27, [#allocation5], 64, 64, 4
    $region13: #{tpu_custom_call.1} parent=1 // pred_fallthru
      _
    // Predicated region
    $region14: #{tpu_custom_call.1} parent=1 // pred_check
      _
    $region15: #{tpu_custom_call.1} parent=1 // pred_check_branch
      %34 = sbr.rel (0) target = $region17
    $region16: #{tpu_custom_call.1} parent=1 // pred_region
      _
    $region17: #{tpu_custom_call.1} parent=1 // pred_fallthru
      _
    // Predicated region
    $region18: #{tpu_custom_call.1} parent=1 // pred_check
      _
    $region19: #{tpu_custom_call.1} parent=1 // pred_check_branch
      %36 = sbr.rel (0) target = $region21
    $region20: #{tpu_custom_call.1} parent=1 // pred_region
      _
    $region21: #{tpu_custom_call.1} parent=1 // pred_fallthru
      _
    // Predicated region
    $region22: #{tpu_custom_call.1} parent=1 // pred_check
      _
    $region23: #{tpu_custom_call.1} parent=1 // pred_check_branch
      %38 = sbr.rel (0) target = $region25
    $region24: #{tpu_custom_call.1} parent=1 // pred_region
      _
    $region25: #{tpu_custom_call.1} parent=1 // pred_fallthru
      _
    // Predicated region
    $region26: #{tpu_custom_call.1} parent=1 // pred_check
      _
    $region27: #{tpu_custom_call.1} parent=1 // pred_check_branch
      %40 = sbr.rel (0) target = $region29
    $region28: #{tpu_custom_call.1} parent=1 // pred_region
      %s42 = ssub.s32 512, 512
      %43 = vsyncadd [#allocation8], %s42
      %s44 = sshll.u32 [#allocation7], 4
      %s45 = int_to_ptr.vmem [resolvable:$true] %s44
      %50 = dma.hbm_to_vmem [thread:$0]  %s6, 512, %s45, [#allocation8], 128, 128, 8
    $region29: #{tpu_custom_call.1} parent=1 // pred_fallthru
      _
    // Predicated region
    $region30: #{tpu_custom_call.1} parent=1 // pred_check
      _
    $region31: #{tpu_custom_call.1} parent=1 // pred_check_branch
      %52 = sbr.rel (0) target = $region33
    $region32: #{tpu_custom_call.1} parent=1 // pred_region
      %s54 = ssub.s32 512, 512
      %55 = vsyncadd [#allocation8], %s54
      %s56 = sshll.u32 [#allocation9], 4
      %s57 = int_to_ptr.vmem [resolvable:$true] %s56
      %62 = dma.hbm_to_vmem [thread:$0]  %s7, 512, %s57, [#allocation8], 128, 128, 8
    $region33: #{tpu_custom_call.1} parent=1 // pred_fallthru
      _
    // Predicated region
    $region34: #{tpu_custom_call.1} parent=1 // pred_check
      _
    $region35: #{tpu_custom_call.1} parent=1 // pred_check_branch
      %64 = sbr.rel (0) target = $region37
    $region36: #{tpu_custom_call.1} parent=1 // pred_region
      _
    $region37: #{tpu_custom_call.1} parent=1 // pred_fallthru
      _
    // Predicated region
    $region38: #{tpu_custom_call.1} parent=1 // pred_check
      _
    $region39: #{tpu_custom_call.1} parent=1 // pred_check_branch
      %66 = sbr.rel (0) target = $region41
    $region40: #{tpu_custom_call.1} parent=1 // pred_region
      %67 = dma.done [#allocation5], 512
    $region41: #{tpu_custom_call.1} parent=1 // pred_fallthru
      _
    // Predicated region
    $region42: #{tpu_custom_call.1} parent=1 // pred_check
      _
    $region43: #{tpu_custom_call.1} parent=1 // pred_check_branch
      %69 = sbr.rel (0) target = $region45
    $region44: #{tpu_custom_call.1} parent=1 // pred_region
      %70 = dma.done [#allocation8], 512
    $region45: #{tpu_custom_call.1} parent=1 // pred_fallthru
      _
    // Predicated region
    $region46: #{tpu_custom_call.1} parent=1 // pred_check
      _
    $region47: #{tpu_custom_call.1} parent=1 // pred_check_branch
      %72 = sbr.rel (0) target = $region49
    $region48: #{tpu_custom_call.1} parent=1 // pred_region
      %73 = dma.done [#allocation8], 512
    $region49: #{tpu_custom_call.1} parent=1 // pred_fallthru
      _
    %p75 = scmp.eq.s32.totalorder 0, 0
    // Predicated region
    $region50: #{tpu_custom_call.1} parent=1 // pred_check
      %p76 = pneg %p75
    $region51: #{tpu_custom_call.1} parent=1 // pred_check_branch
      %78 = sbr.rel (%p76) target = $region53
    $region52: #{tpu_custom_call.1} parent=1 // pred_region
      %vm79 = vcmask 261120
      %80 = vst.msk [vmem:[#allocation2] sm:$0xff] %vm79, 0.0
      %81 = vst.msk [vmem:[#allocation3] sm:$0xff] %vm79, 0.0
    $region53: #{tpu_custom_call.1} parent=1 // pred_fallthru
      _
    %v82 = vld [vmem:[%s1] sm:$0x1]
    %v83 = vld [vmem:[%s1 + $0x1] sm:$0x1]
    %v84 = vld [vmem:[%s1 + $0x2] sm:$0x1]
    %v85 = vld [vmem:[%s1 + $0x3] sm:$0x1]
    %v86 = vld [vmem:[%s1 + $0x4] sm:$0x1]
    %v87 = vld [vmem:[%s1 + $0x5] sm:$0x1]
    %v88 = vld [vmem:[%s1 + $0x6] sm:$0x1]
    %v89 = vld [vmem:[%s1 + $0x7] sm:$0x1]
    %v90 = vld [vmem:[%s0] sm:$0xf]
    %v91 = vld [vmem:[%s0 + $0x4] sm:$0xf]
    %v92 = vld [vmem:[%s0 + $0x8] sm:$0xf]
    %v93 = vld [vmem:[%s0 + $0xc] sm:$0xf]
    %v94 = vld [vmem:[%s0 + $0x10] sm:$0xf]
    %v95 = vld [vmem:[%s0 + $0x14] sm:$0xf]
    %v96 = vld [vmem:[%s0 + $0x18] sm:$0xf]
    %v97 = vld [vmem:[%s0 + $0x1c] sm:$0xf]
    %vm98 = vcmask 64512
    %v100 = vsel %vm98, %v82, 0
    %vm102 = vcmask 1043456
    %v104 = vsel %vm102, %v90, 0
    %106 = vmatprep.subr.bf16.mxu0 0
    %107 = vmatpush1.bf16.msra.mxu0 0
    %108 = vmatprep.subr.bf16.mxu0 0
    %109 = vmatpush1.bf16.msra.mxu0 0
    %110 = vmatprep.subr.bf16.mxu0 0
    %111 = vmatpush1.bf16.msra.mxu0 0
    %112 = vmatprep.subr.bf16.mxu0 0
    %113 = vmatpush1.bf16.msra.mxu0 0
    %114 = vmatprep.subr.bf16.mxu0 0
    %115 = vmatpush1.bf16.msra.mxu0 0
    %116 = vmatprep.subr.bf16.mxu0 0
    %117 = vmatpush1.bf16.msra.mxu0 0
    %118 = vmatprep.subr.bf16.mxu0 0
    %119 = vmatpush1.bf16.msra.mxu0 0
    %120 = vmatprep.subr.bf16.mxu0 0
    %121 = vmatpush1.bf16.msra.mxu0 %v104
    %122 = vmatprep.subr.bf16.mxu0 0
    %123 = vmatpush2.bf16.msra.mxu0 0
    %124 = vmatprep.subr.bf16.mxu0 0
    %125 = vmatpush2.bf16.msra.mxu0 0
    %126 = vmatprep.subr.bf16.mxu0 0
    %127 = vmatpush2.bf16.msra.mxu0 0
    %128 = vmatprep.subr.bf16.mxu0 0
    %129 = vmatpush2.bf16.msra.mxu0 0
    %130 = vmatprep.subr.bf16.mxu0 0
    %131 = vmatpush2.bf16.msra.mxu0 0
    %132 = vmatprep.subr.bf16.mxu0 0
    %133 = vmatpush2.bf16.msra.mxu0 0
    %134 = vmatprep.subr.bf16.mxu0 0
    %135 = vmatpush2.bf16.msra.mxu0 0
    %136 = vmatprep.subr.bf16.mxu0 0
    %137 = vmatpush2.bf16.msra.mxu0 0
    %138 = vmatprep.mubr.bf16.mxu0 0
    %139 = vmatmul.mubr.bf16.gmra.mxu0 %v100
    %v140 = vpop.f32.mrf.mxu0
    %v141 = vadd.f32 0.0, %v140
    %v142 = vpop.f32.mrf.mxu0
    %v143 = vpop.f32.mrf.mxu0
    %v144 = vpop.f32.mrf.mxu0
    %145 = vdwg.mxu0
    %v147 = vsel %vm98, %v83, 0
    %v150 = vsel %vm102, %v91, 0
    %152 = vmatprep.subr.bf16.mxu0 0
    %153 = vmatpush1.bf16.msra.mxu0 0
    %154 = vmatprep.subr.bf16.mxu0 0
    %155 = vmatpush1.bf16.msra.mxu0 0
    %156 = vmatprep.subr.bf16.mxu0 0
    %157 = vmatpush1.bf16.msra.mxu0 0
    %158 = vmatprep.subr.bf16.mxu0 0
    %159 = vmatpush1.bf16.msra.mxu0 0
    %160 = vmatprep.subr.bf16.mxu0 0
    %161 = vmatpush1.bf16.msra.mxu0 0
    %162 = vmatprep.subr.bf16.mxu0 0
    %163 = vmatpush1.bf16.msra.mxu0 0
    %164 = vmatprep.subr.bf16.mxu0 0
    %165 = vmatpush1.bf16.msra.mxu0 0
    %166 = vmatprep.subr.bf16.mxu0 0
    %167 = vmatpush1.bf16.msra.mxu0 %v150
    %168 = vmatprep.subr.bf16.mxu0 0
    %169 = vmatpush2.bf16.msra.mxu0 0
    %170 = vmatprep.subr.bf16.mxu0 0
    %171 = vmatpush2.bf16.msra.mxu0 0
    %172 = vmatprep.subr.bf16.mxu0 0
    %173 = vmatpush2.bf16.msra.mxu0 0
    %174 = vmatprep.subr.bf16.mxu0 0
    %175 = vmatpush2.bf16.msra.mxu0 0
    %176 = vmatprep.subr.bf16.mxu0 0
    %177 = vmatpush2.bf16.msra.mxu0 0
    %178 = vmatprep.subr.bf16.mxu0 0
    %179 = vmatpush2.bf16.msra.mxu0 0
    %180 = vmatprep.subr.bf16.mxu0 0
    %181 = vmatpush2.bf16.msra.mxu0 0
    %182 = vmatprep.subr.bf16.mxu0 0
    %183 = vmatpush2.bf16.msra.mxu0 0
    %184 = vmatprep.mubr.bf16.mxu0 0
    %185 = vmatmul.mubr.bf16.gmra.mxu0 %v147
    %v186 = vpop.f32.mrf.mxu0
    %v187 = vadd.f32 0.0, %v186
    %v188 = vpop.f32.mrf.mxu0
    %v189 = vpop.f32.mrf.mxu0
    %v190 = vpop.f32.mrf.mxu0
    %191 = vdwg.mxu0
    %v193 = vsel %vm98, %v84, 0
    %v196 = vsel %vm102, %v92, 0
    %198 = vmatprep.subr.bf16.mxu0 0
    %199 = vmatpush1.bf16.msra.mxu0 0
    %200 = vmatprep.subr.bf16.mxu0 0
    %201 = vmatpush1.bf16.msra.mxu0 0
    %202 = vmatprep.subr.bf16.mxu0 0
    %203 = vmatpush1.bf16.msra.mxu0 0
    %204 = vmatprep.subr.bf16.mxu0 0
    %205 = vmatpush1.bf16.msra.mxu0 0
    %206 = vmatprep.subr.bf16.mxu0 0
    %207 = vmatpush1.bf16.msra.mxu0 0
    %208 = vmatprep.subr.bf16.mxu0 0
    %209 = vmatpush1.bf16.msra.mxu0 0
    %210 = vmatprep.subr.bf16.mxu0 0
    %211 = vmatpush1.bf16.msra.mxu0 0
    %212 = vmatprep.subr.bf16.mxu0 0
    %213 = vmatpush1.bf16.msra.mxu0 %v196
    %214 = vmatprep.subr.bf16.mxu0 0
    %215 = vmatpush2.bf16.msra.mxu0 0
    %216 = vmatprep.subr.bf16.mxu0 0
    %217 = vmatpush2.bf16.msra.mxu0 0
    %218 = vmatprep.subr.bf16.mxu0 0
    %219 = vmatpush2.bf16.msra.mxu0 0
    %220 = vmatprep.subr.bf16.mxu0 0
    %221 = vmatpush2.bf16.msra.mxu0 0
    %222 = vmatprep.subr.bf16.mxu0 0
    %223 = vmatpush2.bf16.msra.mxu0 0
    %224 = vmatprep.subr.bf16.mxu0 0
    %225 = vmatpush2.bf16.msra.mxu0 0
    %226 = vmatprep.subr.bf16.mxu0 0
    %227 = vmatpush2.bf16.msra.mxu0 0
    %228 = vmatprep.subr.bf16.mxu0 0
    %229 = vmatpush2.bf16.msra.mxu0 0
    %230 = vmatprep.mubr.bf16.mxu0 0
    %231 = vmatmul.mubr.bf16.gmra.mxu0 %v193
    %v232 = vpop.f32.mrf.mxu0
    %v233 = vadd.f32 0.0, %v232
    %v234 = vpop.f32.mrf.mxu0
    %v235 = vpop.f32.mrf.mxu0
    %v236 = vpop.f32.mrf.mxu0
    %237 = vdwg.mxu0
    %v239 = vsel %vm98, %v85, 0
    %v242 = vsel %vm102, %v93, 0
    %244 = vmatprep.subr.bf16.mxu0 0
    %245 = vmatpush1.bf16.msra.mxu0 0
    %246 = vmatprep.subr.bf16.mxu0 0
    %247 = vmatpush1.bf16.msra.mxu0 0
    %248 = vmatprep.subr.bf16.mxu0 0
    %249 = vmatpush1.bf16.msra.mxu0 0
    %250 = vmatprep.subr.bf16.mxu0 0
    %251 = vmatpush1.bf16.msra.mxu0 0
    %252 = vmatprep.subr.bf16.mxu0 0
    %253 = vmatpush1.bf16.msra.mxu0 0
    %254 = vmatprep.subr.bf16.mxu0 0
    %255 = vmatpush1.bf16.msra.mxu0 0
    %256 = vmatprep.subr.bf16.mxu0 0
    %257 = vmatpush1.bf16.msra.mxu0 0
    %258 = vmatprep.subr.bf16.mxu0 0
    %259 = vmatpush1.bf16.msra.mxu0 %v242
    %260 = vmatprep.subr.bf16.mxu0 0
    %261 = vmatpush2.bf16.msra.mxu0 0
    %262 = vmatprep.subr.bf16.mxu0 0
    %263 = vmatpush2.bf16.msra.mxu0 0
    %264 = vmatprep.subr.bf16.mxu0 0
    %265 = vmatpush2.bf16.msra.mxu0 0
    %266 = vmatprep.subr.bf16.mxu0 0
    %267 = vmatpush2.bf16.msra.mxu0 0
    %268 = vmatprep.subr.bf16.mxu0 0
    %269 = vmatpush2.bf16.msra.mxu0 0
    %270 = vmatprep.subr.bf16.mxu0 0
    %271 = vmatpush2.bf16.msra.mxu0 0
    %272 = vmatprep.subr.bf16.mxu0 0
    %273 = vmatpush2.bf16.msra.mxu0 0
    %274 = vmatprep.subr.bf16.mxu0 0
    %275 = vmatpush2.bf16.msra.mxu0 0
    %276 = vmatprep.mubr.bf16.mxu0 0
    %277 = vmatmul.mubr.bf16.gmra.mxu0 %v239
    %v278 = vpop.f32.mrf.mxu0
    %v279 = vadd.f32 0.0, %v278
    %v280 = vpop.f32.mrf.mxu0
    %v281 = vpop.f32.mrf.mxu0
    %v282 = vpop.f32.mrf.mxu0
    %283 = vdwg.mxu0
    %v285 = vsel %vm98, %v86, 0
    %v288 = vsel %vm102, %v94, 0
    %290 = vmatprep.subr.bf16.mxu0 0
    %291 = vmatpush1.bf16.msra.mxu0 0
    %292 = vmatprep.subr.bf16.mxu0 0
    %293 = vmatpush1.bf16.msra.mxu0 0
    %294 = vmatprep.subr.bf16.mxu0 0
    %295 = vmatpush1.bf16.msra.mxu0 0
    %296 = vmatprep.subr.bf16.mxu0 0
    %297 = vmatpush1.bf16.msra.mxu0 0
    %298 = vmatprep.subr.bf16.mxu0 0
    %299 = vmatpush1.bf16.msra.mxu0 0
    %300 = vmatprep.subr.bf16.mxu0 0
    %301 = vmatpush1.bf16.msra.mxu0 0
    %302 = vmatprep.subr.bf16.mxu0 0
    %303 = vmatpush1.bf16.msra.mxu0 0
    %304 = vmatprep.subr.bf16.mxu0 0
    %305 = vmatpush1.bf16.msra.mxu0 %v288
    %306 = vmatprep.subr.bf16.mxu0 0
    %307 = vmatpush2.bf16.msra.mxu0 0
    %308 = vmatprep.subr.bf16.mxu0 0
    %309 = vmatpush2.bf16.msra.mxu0 0
    %310 = vmatprep.subr.bf16.mxu0 0
    %311 = vmatpush2.bf16.msra.mxu0 0
    %312 = vmatprep.subr.bf16.mxu0 0
    %313 = vmatpush2.bf16.msra.mxu0 0
    %314 = vmatprep.subr.bf16.mxu0 0
    %315 = vmatpush2.bf16.msra.mxu0 0
    %316 = vmatprep.subr.bf16.mxu0 0
    %317 = vmatpush2.bf16.msra.mxu0 0
    %318 = vmatprep.subr.bf16.mxu0 0
    %319 = vmatpush2.bf16.msra.mxu0 0
    %320 = vmatprep.subr.bf16.mxu0 0
    %321 = vmatpush2.bf16.msra.mxu0 0
    %322 = vmatprep.mubr.bf16.mxu0 0
    %323 = vmatmul.mubr.bf16.gmra.mxu0 %v285
    %v324 = vpop.f32.mrf.mxu0
    %v325 = vadd.f32 0.0, %v324
    %v326 = vpop.f32.mrf.mxu0
    %v327 = vpop.f32.mrf.mxu0
    %v328 = vpop.f32.mrf.mxu0
    %329 = vdwg.mxu0
    %v331 = vsel %vm98, %v87, 0
    %v334 = vsel %vm102, %v95, 0
    %336 = vmatprep.subr.bf16.mxu0 0
    %337 = vmatpush1.bf16.msra.mxu0 0
    %338 = vmatprep.subr.bf16.mxu0 0
    %339 = vmatpush1.bf16.msra.mxu0 0
    %340 = vmatprep.subr.bf16.mxu0 0
    %341 = vmatpush1.bf16.msra.mxu0 0
    %342 = vmatprep.subr.bf16.mxu0 0
    %343 = vmatpush1.bf16.msra.mxu0 0
    %344 = vmatprep.subr.bf16.mxu0 0
    %345 = vmatpush1.bf16.msra.mxu0 0
    %346 = vmatprep.subr.bf16.mxu0 0
    %347 = vmatpush1.bf16.msra.mxu0 0
    %348 = vmatprep.subr.bf16.mxu0 0
    %349 = vmatpush1.bf16.msra.mxu0 0
    %350 = vmatprep.subr.bf16.mxu0 0
    %351 = vmatpush1.bf16.msra.mxu0 %v334
    %352 = vmatprep.subr.bf16.mxu0 0
    %353 = vmatpush2.bf16.msra.mxu0 0
    %354 = vmatprep.subr.bf16.mxu0 0
    %355 = vmatpush2.bf16.msra.mxu0 0
    %356 = vmatprep.subr.bf16.mxu0 0
    %357 = vmatpush2.bf16.msra.mxu0 0
    %358 = vmatprep.subr.bf16.mxu0 0
    %359 = vmatpush2.bf16.msra.mxu0 0
    %360 = vmatprep.subr.bf16.mxu0 0
    %361 = vmatpush2.bf16.msra.mxu0 0
    %362 = vmatprep.subr.bf16.mxu0 0
    %363 = vmatpush2.bf16.msra.mxu0 0
    %364 = vmatprep.subr.bf16.mxu0 0
    %365 = vmatpush2.bf16.msra.mxu0 0
    %366 = vmatprep.subr.bf16.mxu0 0
    %367 = vmatpush2.bf16.msra.mxu0 0
    %368 = vmatprep.mubr.bf16.mxu0 0
    %369 = vmatmul.mubr.bf16.gmra.mxu0 %v331
    %v370 = vpop.f32.mrf.mxu0
    %v371 = vadd.f32 0.0, %v370
    %v372 = vpop.f32.mrf.mxu0
    %v373 = vpop.f32.mrf.mxu0
    %v374 = vpop.f32.mrf.mxu0
    %375 = vdwg.mxu0
    %v377 = vsel %vm98, %v88, 0
    %v380 = vsel %vm102, %v96, 0
    %382 = vmatprep.subr.bf16.mxu0 0
    %383 = vmatpush1.bf16.msra.mxu0 0
    %384 = vmatprep.subr.bf16.mxu0 0
    %385 = vmatpush1.bf16.msra.mxu0 0
    %386 = vmatprep.subr.bf16.mxu0 0
    %387 = vmatpush1.bf16.msra.mxu0 0
    %388 = vmatprep.subr.bf16.mxu0 0
    %389 = vmatpush1.bf16.msra.mxu0 0
    %390 = vmatprep.subr.bf16.mxu0 0
    %391 = vmatpush1.bf16.msra.mxu0 0
    %392 = vmatprep.subr.bf16.mxu0 0
    %393 = vmatpush1.bf16.msra.mxu0 0
    %394 = vmatprep.subr.bf16.mxu0 0
    %395 = vmatpush1.bf16.msra.mxu0 0
    %396 = vmatprep.subr.bf16.mxu0 0
    %397 = vmatpush1.bf16.msra.mxu0 %v380
    %398 = vmatprep.subr.bf16.mxu0 0
    %399 = vmatpush2.bf16.msra.mxu0 0
    %400 = vmatprep.subr.bf16.mxu0 0
    %401 = vmatpush2.bf16.msra.mxu0 0
    %402 = vmatprep.subr.bf16.mxu0 0
    %403 = vmatpush2.bf16.msra.mxu0 0
    %404 = vmatprep.subr.bf16.mxu0 0
    %405 = vmatpush2.bf16.msra.mxu0 0
    %406 = vmatprep.subr.bf16.mxu0 0
    %407 = vmatpush2.bf16.msra.mxu0 0
    %408 = vmatprep.subr.bf16.mxu0 0
    %409 = vmatpush2.bf16.msra.mxu0 0
    %410 = vmatprep.subr.bf16.mxu0 0
    %411 = vmatpush2.bf16.msra.mxu0 0
    %412 = vmatprep.subr.bf16.mxu0 0
    %413 = vmatpush2.bf16.msra.mxu0 0
    %414 = vmatprep.mubr.bf16.mxu0 0
    %415 = vmatmul.mubr.bf16.gmra.mxu0 %v377
    %v416 = vpop.f32.mrf.mxu0
    %v417 = vadd.f32 0.0, %v416
    %v418 = vpop.f32.mrf.mxu0
    %v419 = vpop.f32.mrf.mxu0
    %v420 = vpop.f32.mrf.mxu0
    %421 = vdwg.mxu0
    %v423 = vsel %vm98, %v89, 0
    %v426 = vsel %vm102, %v97, 0
    %428 = vmatprep.subr.bf16.mxu0 0
    %429 = vmatpush1.bf16.msra.mxu0 0
    %430 = vmatprep.subr.bf16.mxu0 0
    %431 = vmatpush1.bf16.msra.mxu0 0
    %432 = vmatprep.subr.bf16.mxu0 0
    %433 = vmatpush1.bf16.msra.mxu0 0
    %434 = vmatprep.subr.bf16.mxu0 0
    %435 = vmatpush1.bf16.msra.mxu0 0
    %436 = vmatprep.subr.bf16.mxu0 0
    %437 = vmatpush1.bf16.msra.mxu0 0
    %438 = vmatprep.subr.bf16.mxu0 0
    %439 = vmatpush1.bf16.msra.mxu0 0
    %440 = vmatprep.subr.bf16.mxu0 0
    %441 = vmatpush1.bf16.msra.mxu0 0
    %442 = vmatprep.subr.bf16.mxu0 0
    %443 = vmatpush1.bf16.msra.mxu0 %v426
    %444 = vmatprep.subr.bf16.mxu0 0
    %445 = vmatpush2.bf16.msra.mxu0 0
    %446 = vmatprep.subr.bf16.mxu0 0
    %447 = vmatpush2.bf16.msra.mxu0 0
    %448 = vmatprep.subr.bf16.mxu0 0
    %449 = vmatpush2.bf16.msra.mxu0 0
    %450 = vmatprep.subr.bf16.mxu0 0
    %451 = vmatpush2.bf16.msra.mxu0 0
    %452 = vmatprep.subr.bf16.mxu0 0
    %453 = vmatpush2.bf16.msra.mxu0 0
    %454 = vmatprep.subr.bf16.mxu0 0
    %455 = vmatpush2.bf16.msra.mxu0 0
    %456 = vmatprep.subr.bf16.mxu0 0
    %457 = vmatpush2.bf16.msra.mxu0 0
    %458 = vmatprep.subr.bf16.mxu0 0
    %459 = vmatpush2.bf16.msra.mxu0 0
    %460 = vmatprep.mubr.bf16.mxu0 0
    %461 = vmatmul.mubr.bf16.gmra.mxu0 %v423
    %v462 = vpop.f32.mrf.mxu0
    %v463 = vadd.f32 0.0, %v462
    %v464 = vpop.f32.mrf.mxu0
    %v465 = vpop.f32.mrf.mxu0
    %v466 = vpop.f32.mrf.mxu0
    %467 = vdwg.mxu0
    %v468 = vld [vmem:[%s3] sm:$0x1]
    %v469 = vld [vmem:[%s3 + $0x1] sm:$0x1]
    %v470 = vld [vmem:[%s3 + $0x2] sm:$0x1]
    %v471 = vld [vmem:[%s3 + $0x3] sm:$0x1]
    %v472 = vld [vmem:[%s3 + $0x4] sm:$0x1]
    %v473 = vld [vmem:[%s3 + $0x5] sm:$0x1]
    %v474 = vld [vmem:[%s3 + $0x6] sm:$0x1]
    %v475 = vld [vmem:[%s3 + $0x7] sm:$0x1]
    %v476 = vld [vmem:[#allocation4] sm:$0xf]
    %v477 = vld [vmem:[#allocation4 + $0x4] sm:$0xf]
    %v478 = vld [vmem:[#allocation4 + $0x8] sm:$0xf]
    %v479 = vld [vmem:[#allocation4 + $0xc] sm:$0xf]
    %v480 = vld [vmem:[#allocation4 + $0x10] sm:$0xf]
    %v481 = vld [vmem:[#allocation4 + $0x14] sm:$0xf]
    %v482 = vld [vmem:[#allocation4 + $0x18] sm:$0xf]
    %v483 = vld [vmem:[#allocation4 + $0x1c] sm:$0xf]
    %v485 = vsel %vm98, %v468, 0
    %v488 = vsel %vm102, %v476, 0
    %490 = vmatprep.subr.bf16.mxu0 0
    %491 = vmatpush1.bf16.msra.mxu0 0
    %492 = vmatprep.subr.bf16.mxu0 0
    %493 = vmatpush1.bf16.msra.mxu0 0
    %494 = vmatprep.subr.bf16.mxu0 0
    %495 = vmatpush1.bf16.msra.mxu0 0
    %496 = vmatprep.subr.bf16.mxu0 0
    %497 = vmatpush1.bf16.msra.mxu0 0
    %498 = vmatprep.subr.bf16.mxu0 0
    %499 = vmatpush1.bf16.msra.mxu0 0
    %500 = vmatprep.subr.bf16.mxu0 0
    %501 = vmatpush1.bf16.msra.mxu0 0
    %502 = vmatprep.subr.bf16.mxu0 0
    %503 = vmatpush1.bf16.msra.mxu0 0
    %504 = vmatprep.subr.bf16.mxu0 0
    %505 = vmatpush1.bf16.msra.mxu0 %v488
    %506 = vmatprep.subr.bf16.mxu0 0
    %507 = vmatpush2.bf16.msra.mxu0 0
    %508 = vmatprep.subr.bf16.mxu0 0
    %509 = vmatpush2.bf16.msra.mxu0 0
    %510 = vmatprep.subr.bf16.mxu0 0
    %511 = vmatpush2.bf16.msra.mxu0 0
    %512 = vmatprep.subr.bf16.mxu0 0
    %513 = vmatpush2.bf16.msra.mxu0 0
    %514 = vmatprep.subr.bf16.mxu0 0
    %515 = vmatpush2.bf16.msra.mxu0 0
    %516 = vmatprep.subr.bf16.mxu0 0
    %517 = vmatpush2.bf16.msra.mxu0 0
    %518 = vmatprep.subr.bf16.mxu0 0
    %519 = vmatpush2.bf16.msra.mxu0 0
    %520 = vmatprep.subr.bf16.mxu0 0
    %521 = vmatpush2.bf16.msra.mxu0 0
    %522 = vmatprep.mubr.bf16.mxu0 0
    %523 = vmatmul.mubr.bf16.gmra.mxu0 %v485
    %v524 = vpop.f32.mrf.mxu0
    %v525 = vadd.f32 0.0, %v524
    %v526 = vpop.f32.mrf.mxu0
    %v527 = vpop.f32.mrf.mxu0
    %v528 = vpop.f32.mrf.mxu0
    %529 = vdwg.mxu0
    %v531 = vsel %vm98, %v469, 0
    %v534 = vsel %vm102, %v477, 0
    %536 = vmatprep.subr.bf16.mxu0 0
    %537 = vmatpush1.bf16.msra.mxu0 0
    %538 = vmatprep.subr.bf16.mxu0 0
    %539 = vmatpush1.bf16.msra.mxu0 0
    %540 = vmatprep.subr.bf16.mxu0 0
    %541 = vmatpush1.bf16.msra.mxu0 0
    %542 = vmatprep.subr.bf16.mxu0 0
    %543 = vmatpush1.bf16.msra.mxu0 0
    %544 = vmatprep.subr.bf16.mxu0 0
    %545 = vmatpush1.bf16.msra.mxu0 0
    %546 = vmatprep.subr.bf16.mxu0 0
    %547 = vmatpush1.bf16.msra.mxu0 0
    %548 = vmatprep.subr.bf16.mxu0 0
    %549 = vmatpush1.bf16.msra.mxu0 0
    %550 = vmatprep.subr.bf16.mxu0 0
    %551 = vmatpush1.bf16.msra.mxu0 %v534
    %552 = vmatprep.subr.bf16.mxu0 0
    %553 = vmatpush2.bf16.msra.mxu0 0
    %554 = vmatprep.subr.bf16.mxu0 0
    %555 = vmatpush2.bf16.msra.mxu0 0
    %556 = vmatprep.subr.bf16.mxu0 0
    %557 = vmatpush2.bf16.msra.mxu0 0
    %558 = vmatprep.subr.bf16.mxu0 0
    %559 = vmatpush2.bf16.msra.mxu0 0
    %560 = vmatprep.subr.bf16.mxu0 0
    %561 = vmatpush2.bf16.msra.mxu0 0
    %562 = vmatprep.subr.bf16.mxu0 0
    %563 = vmatpush2.bf16.msra.mxu0 0
    %564 = vmatprep.subr.bf16.mxu0 0
    %565 = vmatpush2.bf16.msra.mxu0 0
    %566 = vmatprep.subr.bf16.mxu0 0
    %567 = vmatpush2.bf16.msra.mxu0 0
    %568 = vmatprep.mubr.bf16.mxu0 0
    %569 = vmatmul.mubr.bf16.gmra.mxu0 %v531
    %v570 = vpop.f32.mrf.mxu0
    %v571 = vadd.f32 0.0, %v570
    %v572 = vpop.f32.mrf.mxu0
    %v573 = vpop.f32.mrf.mxu0
    %v574 = vpop.f32.mrf.mxu0
    %575 = vdwg.mxu0
    %v577 = vsel %vm98, %v470, 0
    %v580 = vsel %vm102, %v478, 0
    %582 = vmatprep.subr.bf16.mxu0 0
    %583 = vmatpush1.bf16.msra.mxu0 0
    %584 = vmatprep.subr.bf16.mxu0 0
    %585 = vmatpush1.bf16.msra.mxu0 0
    %586 = vmatprep.subr.bf16.mxu0 0
    %587 = vmatpush1.bf16.msra.mxu0 0
    %588 = vmatprep.subr.bf16.mxu0 0
    %589 = vmatpush1.bf16.msra.mxu0 0
    %590 = vmatprep.subr.bf16.mxu0 0
    %591 = vmatpush1.bf16.msra.mxu0 0
    %592 = vmatprep.subr.bf16.mxu0 0
    %593 = vmatpush1.bf16.msra.mxu0 0
    %594 = vmatprep.subr.bf16.mxu0 0
    %595 = vmatpush1.bf16.msra.mxu0 0
    %596 = vmatprep.subr.bf16.mxu0 0
    %597 = vmatpush1.bf16.msra.mxu0 %v580
    %598 = vmatprep.subr.bf16.mxu0 0
    %599 = vmatpush2.bf16.msra.mxu0 0
    %600 = vmatprep.subr.bf16.mxu0 0
    %601 = vmatpush2.bf16.msra.mxu0 0
    %602 = vmatprep.subr.bf16.mxu0 0
    %603 = vmatpush2.bf16.msra.mxu0 0
    %604 = vmatprep.subr.bf16.mxu0 0
    %605 = vmatpush2.bf16.msra.mxu0 0
    %606 = vmatprep.subr.bf16.mxu0 0
    %607 = vmatpush2.bf16.msra.mxu0 0
    %608 = vmatprep.subr.bf16.mxu0 0
    %609 = vmatpush2.bf16.msra.mxu0 0
    %610 = vmatprep.subr.bf16.mxu0 0
    %611 = vmatpush2.bf16.msra.mxu0 0
    %612 = vmatprep.subr.bf16.mxu0 0
    %613 = vmatpush2.bf16.msra.mxu0 0
    %614 = vmatprep.mubr.bf16.mxu0 0
    %615 = vmatmul.mubr.bf16.gmra.mxu0 %v577
    %v616 = vpop.f32.mrf.mxu0
    %v617 = vadd.f32 0.0, %v616
    %v618 = vpop.f32.mrf.mxu0
    %v619 = vpop.f32.mrf.mxu0
    %v620 = vpop.f32.mrf.mxu0
    %621 = vdwg.mxu0
    %v623 = vsel %vm98, %v471, 0
    %v626 = vsel %vm102, %v479, 0
    %628 = vmatprep.subr.bf16.mxu0 0
    %629 = vmatpush1.bf16.msra.mxu0 0
    %630 = vmatprep.subr.bf16.mxu0 0
    %631 = vmatpush1.bf16.msra.mxu0 0
    %632 = vmatprep.subr.bf16.mxu0 0
    %633 = vmatpush1.bf16.msra.mxu0 0
    %634 = vmatprep.subr.bf16.mxu0 0
    %635 = vmatpush1.bf16.msra.mxu0 0
    %636 = vmatprep.subr.bf16.mxu0 0
    %637 = vmatpush1.bf16.msra.mxu0 0
    %638 = vmatprep.subr.bf16.mxu0 0
    %639 = vmatpush1.bf16.msra.mxu0 0
    %640 = vmatprep.subr.bf16.mxu0 0
    %641 = vmatpush1.bf16.msra.mxu0 0
    %642 = vmatprep.subr.bf16.mxu0 0
    %643 = vmatpush1.bf16.msra.mxu0 %v626
    %644 = vmatprep.subr.bf16.mxu0 0
    %645 = vmatpush2.bf16.msra.mxu0 0
    %646 = vmatprep.subr.bf16.mxu0 0
    %647 = vmatpush2.bf16.msra.mxu0 0
    %648 = vmatprep.subr.bf16.mxu0 0
    %649 = vmatpush2.bf16.msra.mxu0 0
    %650 = vmatprep.subr.bf16.mxu0 0
    %651 = vmatpush2.bf16.msra.mxu0 0
    %652 = vmatprep.subr.bf16.mxu0 0
    %653 = vmatpush2.bf16.msra.mxu0 0
    %654 = vmatprep.subr.bf16.mxu0 0
    %655 = vmatpush2.bf16.msra.mxu0 0
    %656 = vmatprep.subr.bf16.mxu0 0
    %657 = vmatpush2.bf16.msra.mxu0 0
    %658 = vmatprep.subr.bf16.mxu0 0
    %659 = vmatpush2.bf16.msra.mxu0 0
    %660 = vmatprep.mubr.bf16.mxu0 0
    %661 = vmatmul.mubr.bf16.gmra.mxu0 %v623
    %v662 = vpop.f32.mrf.mxu0
    %v663 = vadd.f32 0.0, %v662
    %v664 = vpop.f32.mrf.mxu0
    %v665 = vpop.f32.mrf.mxu0
    %v666 = vpop.f32.mrf.mxu0
    %667 = vdwg.mxu0
    %v669 = vsel %vm98, %v472, 0
    %v672 = vsel %vm102, %v480, 0
    %674 = vmatprep.subr.bf16.mxu0 0
    %675 = vmatpush1.bf16.msra.mxu0 0
    %676 = vmatprep.subr.bf16.mxu0 0
    %677 = vmatpush1.bf16.msra.mxu0 0
    %678 = vmatprep.subr.bf16.mxu0 0
    %679 = vmatpush1.bf16.msra.mxu0 0
    %680 = vmatprep.subr.bf16.mxu0 0
    %681 = vmatpush1.bf16.msra.mxu0 0
    %682 = vmatprep.subr.bf16.mxu0 0
    %683 = vmatpush1.bf16.msra.mxu0 0
    %684 = vmatprep.subr.bf16.mxu0 0
    %685 = vmatpush1.bf16.msra.mxu0 0
    %686 = vmatprep.subr.bf16.mxu0 0
    %687 = vmatpush1.bf16.msra.mxu0 0
    %688 = vmatprep.subr.bf16.mxu0 0
    %689 = vmatpush1.bf16.msra.mxu0 %v672
    %690 = vmatprep.subr.bf16.mxu0 0
    %691 = vmatpush2.bf16.msra.mxu0 0
    %692 = vmatprep.subr.bf16.mxu0 0
    %693 = vmatpush2.bf16.msra.mxu0 0
    %694 = vmatprep.subr.bf16.mxu0 0
    %695 = vmatpush2.bf16.msra.mxu0 0
    %696 = vmatprep.subr.bf16.mxu0 0
    %697 = vmatpush2.bf16.msra.mxu0 0
    %698 = vmatprep.subr.bf16.mxu0 0
    %699 = vmatpush2.bf16.msra.mxu0 0
    %700 = vmatprep.subr.bf16.mxu0 0
    %701 = vmatpush2.bf16.msra.mxu0 0
    %702 = vmatprep.subr.bf16.mxu0 0
    %703 = vmatpush2.bf16.msra.mxu0 0
    %704 = vmatprep.subr.bf16.mxu0 0
    %705 = vmatpush2.bf16.msra.mxu0 0
    %706 = vmatprep.mubr.bf16.mxu0 0
    %707 = vmatmul.mubr.bf16.gmra.mxu0 %v669
    %v708 = vpop.f32.mrf.mxu0
    %v709 = vadd.f32 0.0, %v708
    %v710 = vpop.f32.mrf.mxu0
    %v711 = vpop.f32.mrf.mxu0
    %v712 = vpop.f32.mrf.mxu0
    %713 = vdwg.mxu0
    %v715 = vsel %vm98, %v473, 0
    %v718 = vsel %vm102, %v481, 0
    %720 = vmatprep.subr.bf16.mxu0 0
    %721 = vmatpush1.bf16.msra.mxu0 0
    %722 = vmatprep.subr.bf16.mxu0 0
    %723 = vmatpush1.bf16.msra.mxu0 0
    %724 = vmatprep.subr.bf16.mxu0 0
    %725 = vmatpush1.bf16.msra.mxu0 0
    %726 = vmatprep.subr.bf16.mxu0 0
    %727 = vmatpush1.bf16.msra.mxu0 0
    %728 = vmatprep.subr.bf16.mxu0 0
    %729 = vmatpush1.bf16.msra.mxu0 0
    %730 = vmatprep.subr.bf16.mxu0 0
    %731 = vmatpush1.bf16.msra.mxu0 0
    %732 = vmatprep.subr.bf16.mxu0 0
    %733 = vmatpush1.bf16.msra.mxu0 0
    %734 = vmatprep.subr.bf16.mxu0 0
    %735 = vmatpush1.bf16.msra.mxu0 %v718
    %736 = vmatprep.subr.bf16.mxu0 0
    %737 = vmatpush2.bf16.msra.mxu0 0
    %738 = vmatprep.subr.bf16.mxu0 0
    %739 = vmatpush2.bf16.msra.mxu0 0
    %740 = vmatprep.subr.bf16.mxu0 0
    %741 = vmatpush2.bf16.msra.mxu0 0
    %742 = vmatprep.subr.bf16.mxu0 0
    %743 = vmatpush2.bf16.msra.mxu0 0
    %744 = vmatprep.subr.bf16.mxu0 0
    %745 = vmatpush2.bf16.msra.mxu0 0
    %746 = vmatprep.subr.bf16.mxu0 0
    %747 = vmatpush2.bf16.msra.mxu0 0
    %748 = vmatprep.subr.bf16.mxu0 0
    %749 = vmatpush2.bf16.msra.mxu0 0
    %750 = vmatprep.subr.bf16.mxu0 0
    %751 = vmatpush2.bf16.msra.mxu0 0
    %752 = vmatprep.mubr.bf16.mxu0 0
    %753 = vmatmul.mubr.bf16.gmra.mxu0 %v715
    %v754 = vpop.f32.mrf.mxu0
    %v755 = vadd.f32 0.0, %v754
    %v756 = vpop.f32.mrf.mxu0
    %v757 = vpop.f32.mrf.mxu0
    %v758 = vpop.f32.mrf.mxu0
    %759 = vdwg.mxu0
    %v761 = vsel %vm98, %v474, 0
    %v764 = vsel %vm102, %v482, 0
    %766 = vmatprep.subr.bf16.mxu0 0
    %767 = vmatpush1.bf16.msra.mxu0 0
    %768 = vmatprep.subr.bf16.mxu0 0
    %769 = vmatpush1.bf16.msra.mxu0 0
    %770 = vmatprep.subr.bf16.mxu0 0
    %771 = vmatpush1.bf16.msra.mxu0 0
    %772 = vmatprep.subr.bf16.mxu0 0
    %773 = vmatpush1.bf16.msra.mxu0 0
    %774 = vmatprep.subr.bf16.mxu0 0
    %775 = vmatpush1.bf16.msra.mxu0 0
    %776 = vmatprep.subr.bf16.mxu0 0
    %777 = vmatpush1.bf16.msra.mxu0 0
    %778 = vmatprep.subr.bf16.mxu0 0
    %779 = vmatpush1.bf16.msra.mxu0 0
    %780 = vmatprep.subr.bf16.mxu0 0
    %781 = vmatpush1.bf16.msra.mxu0 %v764
    %782 = vmatprep.subr.bf16.mxu0 0
    %783 = vmatpush2.bf16.msra.mxu0 0
    %784 = vmatprep.subr.bf16.mxu0 0
    %785 = vmatpush2.bf16.msra.mxu0 0
    %786 = vmatprep.subr.bf16.mxu0 0
    %787 = vmatpush2.bf16.msra.mxu0 0
    %788 = vmatprep.subr.bf16.mxu0 0
    %789 = vmatpush2.bf16.msra.mxu0 0
    %790 = vmatprep.subr.bf16.mxu0 0
    %791 = vmatpush2.bf16.msra.mxu0 0
    %792 = vmatprep.subr.bf16.mxu0 0
    %793 = vmatpush2.bf16.msra.mxu0 0
    %794 = vmatprep.subr.bf16.mxu0 0
    %795 = vmatpush2.bf16.msra.mxu0 0
    %796 = vmatprep.subr.bf16.mxu0 0
    %797 = vmatpush2.bf16.msra.mxu0 0
    %798 = vmatprep.mubr.bf16.mxu0 0
    %799 = vmatmul.mubr.bf16.gmra.mxu0 %v761
    %v800 = vpop.f32.mrf.mxu0
    %v801 = vadd.f32 0.0, %v800
    %v802 = vpop.f32.mrf.mxu0
    %v803 = vpop.f32.mrf.mxu0
    %v804 = vpop.f32.mrf.mxu0
    %805 = vdwg.mxu0
    %v807 = vsel %vm98, %v475, 0
    %v810 = vsel %vm102, %v483, 0
    %812 = vmatprep.subr.bf16.mxu0 0
    %813 = vmatpush1.bf16.msra.mxu0 0
    %814 = vmatprep.subr.bf16.mxu0 0
    %815 = vmatpush1.bf16.msra.mxu0 0
    %816 = vmatprep.subr.bf16.mxu0 0
    %817 = vmatpush1.bf16.msra.mxu0 0
    %818 = vmatprep.subr.bf16.mxu0 0
    %819 = vmatpush1.bf16.msra.mxu0 0
    %820 = vmatprep.subr.bf16.mxu0 0
    %821 = vmatpush1.bf16.msra.mxu0 0
    %822 = vmatprep.subr.bf16.mxu0 0
    %823 = vmatpush1.bf16.msra.mxu0 0
    %824 = vmatprep.subr.bf16.mxu0 0
    %825 = vmatpush1.bf16.msra.mxu0 0
    %826 = vmatprep.subr.bf16.mxu0 0
    %827 = vmatpush1.bf16.msra.mxu0 %v810
    %828 = vmatprep.subr.bf16.mxu0 0
    %829 = vmatpush2.bf16.msra.mxu0 0
    %830 = vmatprep.subr.bf16.mxu0 0
    %831 = vmatpush2.bf16.msra.mxu0 0
    %832 = vmatprep.subr.bf16.mxu0 0
    %833 = vmatpush2.bf16.msra.mxu0 0
    %834 = vmatprep.subr.bf16.mxu0 0
    %835 = vmatpush2.bf16.msra.mxu0 0
    %836 = vmatprep.subr.bf16.mxu0 0
    %837 = vmatpush2.bf16.msra.mxu0 0
    %838 = vmatprep.subr.bf16.mxu0 0
    %839 = vmatpush2.bf16.msra.mxu0 0
    %840 = vmatprep.subr.bf16.mxu0 0
    %841 = vmatpush2.bf16.msra.mxu0 0
    %842 = vmatprep.subr.bf16.mxu0 0
    %843 = vmatpush2.bf16.msra.mxu0 0
    %844 = vmatprep.mubr.bf16.mxu0 0
    %845 = vmatmul.mubr.bf16.gmra.mxu0 %v807
    %v846 = vpop.f32.mrf.mxu0
    %v847 = vadd.f32 0.0, %v846
    %v848 = vpop.f32.mrf.mxu0
    %v849 = vpop.f32.mrf.mxu0
    %v850 = vpop.f32.mrf.mxu0
    %851 = vdwg.mxu0
    %v852 = vld [vmem:[#allocation2] sm:$0xff]
    %v861 = vrot.slane %v187, 7
    %vm862 = vcmask 1041409
    %v863 = vsel %vm862, %v861, %v141
    %v864 = vrot.slane %v233, 6
    %vm865 = vcmask 1042434
    %v866 = vsel %vm865, %v864, %v863
    %v867 = vrot.slane %v279, 5
    %vm868 = vcmask 1043459
    %v869 = vsel %vm868, %v867, %v866
    %v870 = vrot.slane %v325, 4
    %vm871 = vcmask 1044484
    %v872 = vsel %vm871, %v870, %v869
    %v873 = vrot.slane %v371, 3
    %vm874 = vcmask 1045509
    %v875 = vsel %vm874, %v873, %v872
    %v876 = vrot.slane %v417, 2
    %vm877 = vcmask 1046534
    %v878 = vsel %vm877, %v876, %v875
    %v879 = vrot.slane %v463, 1
    %vm880 = vcmask 1047559
    %v881 = vsel %vm880, %v879, %v878
    %v883 = vadd.f32 %v852, %v881
    %vm884 = vcmask 261120
    %885 = vst.msk [vmem:[#allocation2] sm:$0xff] %vm884, %v883
    %v886 = vld [vmem:[#allocation3] sm:$0xff]
    %v895 = vrot.slane %v571, 7
    %v896 = vsel %vm862, %v895, %v525
    %v897 = vrot.slane %v617, 6
    %v898 = vsel %vm865, %v897, %v896
    %v899 = vrot.slane %v663, 5
    %v900 = vsel %vm868, %v899, %v898
    %v901 = vrot.slane %v709, 4
    %v902 = vsel %vm871, %v901, %v900
    %v903 = vrot.slane %v755, 3
    %v904 = vsel %vm874, %v903, %v902
    %v905 = vrot.slane %v801, 2
    %v906 = vsel %vm877, %v905, %v904
    %v907 = vrot.slane %v847, 1
    %v908 = vsel %vm880, %v907, %v906
    %v910 = vadd.f32 %v886, %v908
    %911 = vst.msk [vmem:[#allocation3] sm:$0xff] %vm884, %v910
    // Predicated region
    $region54: #{tpu_custom_call.1} parent=1 // pred_check
      %p912 = pneg %p75
    $region55: #{tpu_custom_call.1} parent=1 // pred_check_branch
      %914 = sbr.rel (%p912) target = $region57
    $region56: #{tpu_custom_call.1} parent=1 // pred_region
      %v915 = vld [vmem:[#allocation2] sm:$0xff]
      %v916 = vld [vmem:[%s4] sm:$0xff]
      %v917 = vmax.f32 %v916, 1.0
      %919 = vset.pattern.permute.xlu0 0
      %920 = vperm.xlu0 %919, %v917
      %v921 = vpop.permute.xlu0 %920
      %v923 = vrcp.pop %v921
      %v924 = vmul.f32 %v915, %v923
      %v925 = vtanh.pop %v924
      %v926 = vld [vmem:[#allocation3] sm:$0xff]
      %v927 = vld [vmem:[%s5] sm:$0xff]
      %v928 = vmax.f32 %v927, 1.0
      %930 = vset.pattern.permute.xlu0 0
      %931 = vperm.xlu0 %930, %v928
      %v932 = vpop.permute.xlu0 %931
      %v934 = vrcp.pop %v932
      %v935 = vmul.f32 %v926, %v934
      %v936 = vtanh.pop %v935
      %v937 = vld [vmem:[#allocation7] sm:$0xff]
      %v938 = vld [vmem:[#allocation7 + $0x8] sm:$0xff]
      %v939 = vld [vmem:[#allocation7 + $0x10] sm:$0xff]
      %v940 = vld [vmem:[#allocation7 + $0x18] sm:$0xff]
      %v941 = vld [vmem:[#allocation9] sm:$0xff]
      %v942 = vld [vmem:[#allocation9 + $0x8] sm:$0xff]
      %v943 = vld [vmem:[#allocation9 + $0x10] sm:$0xff]
      %v944 = vld [vmem:[#allocation9 + $0x18] sm:$0xff]
      %v946 = vsel %vm884, %v936, 0
      %948 = vmatprep.subr.mxu0 0.0
      %949 = vmatpush1.msra.mxu0 0.0
      %950 = vmatprep.subr.mxu0 0.0
      %951 = vmatpush1.msra.mxu0 0.0
      %952 = vmatprep.subr.mxu0 0.0
      %953 = vmatpush1.msra.mxu0 0.0
      %954 = vmatprep.subr.mxu0 0.0
      %955 = vmatpush1.msra.mxu0 0.0
      %956 = vmatprep.subr.mxu0 0.0
      %957 = vmatpush1.msra.mxu0 0.0
      %958 = vmatprep.subr.mxu0 0.0
      %959 = vmatpush1.msra.mxu0 0.0
      %960 = vmatprep.subr.mxu0 0.0
      %961 = vmatpush1.msra.mxu0 0.0
      %962 = vmatprep.subr.mxu0 0.0
      %963 = vmatpush1.msra.mxu0 0.0
      %964 = vmatprep.subr.mxu0 0.0
      %965 = vmatpush1.msra.mxu0 0.0
      %966 = vmatprep.subr.mxu0 0.0
      %967 = vmatpush1.msra.mxu0 0.0
      %968 = vmatprep.subr.mxu0 0.0
      %969 = vmatpush1.msra.mxu0 0.0
      %970 = vmatprep.subr.mxu0 0.0
      %971 = vmatpush1.msra.mxu0 0.0
      %972 = vmatprep.subr.mxu0 0.0
      %973 = vmatpush1.msra.mxu0 %v944
      %974 = vmatprep.subr.mxu0 0.0
      %975 = vmatpush1.msra.mxu0 %v943
      %976 = vmatprep.subr.mxu0 0.0
      %977 = vmatpush1.msra.mxu0 %v942
      %978 = vmatprep.subr.mxu0 0.0
      %979 = vmatpush1.msra.mxu0 %v941
      %980 = vmatprep.subr.mxu0 0.0
      %981 = vmatpush2.msra.mxu0 0.0
      %982 = vmatprep.subr.mxu0 0.0
      %983 = vmatpush2.msra.mxu0 0.0
      %984 = vmatprep.subr.mxu0 0.0
      %985 = vmatpush2.msra.mxu0 0.0
      %986 = vmatprep.subr.mxu0 0.0
      %987 = vmatpush2.msra.mxu0 0.0
      %988 = vmatprep.subr.mxu0 0.0
      %989 = vmatpush2.msra.mxu0 0.0
      %990 = vmatprep.subr.mxu0 0.0
      %991 = vmatpush2.msra.mxu0 0.0
      %992 = vmatprep.subr.mxu0 0.0
      %993 = vmatpush2.msra.mxu0 0.0
      %994 = vmatprep.subr.mxu0 0.0
      %995 = vmatpush2.msra.mxu0 0.0
      %996 = vmatprep.subr.mxu0 0.0
      %997 = vmatpush2.msra.mxu0 0.0
      %998 = vmatprep.subr.mxu0 0.0
      %999 = vmatpush2.msra.mxu0 0.0
      %1000 = vmatprep.subr.mxu0 0.0
      %1001 = vmatpush2.msra.mxu0 0.0
      %1002 = vmatprep.subr.mxu0 0.0
      %1003 = vmatpush2.msra.mxu0 0.0
      %1004 = vmatprep.subr.mxu0 0.0
      %1005 = vmatpush2.msra.mxu0 0.0
      %1006 = vmatprep.subr.mxu0 0.0
      %1007 = vmatpush2.msra.mxu0 0.0
      %1008 = vmatprep.subr.mxu0 0.0
      %1009 = vmatpush2.msra.mxu0 0.0
      %1010 = vmatprep.subr.mxu0 0.0
      %1011 = vmatpush2.msra.mxu0 0.0
      %1012 = vmatprep.mubr.f32.mxu0 0.0
      %1013 = vmatmul.mubr.f32.gmra.mxu0 %v946
      %v1014 = vpop.f32.mrf.mxu0
      %v1015 = vadd.f32 0.0, %v1014
      %v1016 = vpop.f32.mrf.mxu0
      %1017 = vdwg.mxu0
      %v1019 = vsel %vm884, %v925, 0
      %1021 = vmatprep.subr.mxu0 0.0
      %1022 = vmatpush1.msra.mxu0 0.0
      %1023 = vmatprep.subr.mxu0 0.0
      %1024 = vmatpush1.msra.mxu0 0.0
      %1025 = vmatprep.subr.mxu0 0.0
      %1026 = vmatpush1.msra.mxu0 0.0
      %1027 = vmatprep.subr.mxu0 0.0
      %1028 = vmatpush1.msra.mxu0 0.0
      %1029 = vmatprep.subr.mxu0 0.0
      %1030 = vmatpush1.msra.mxu0 0.0
      %1031 = vmatprep.subr.mxu0 0.0
      %1032 = vmatpush1.msra.mxu0 0.0
      %1033 = vmatprep.subr.mxu0 0.0
      %1034 = vmatpush1.msra.mxu0 0.0
      %1035 = vmatprep.subr.mxu0 0.0
      %1036 = vmatpush1.msra.mxu0 0.0
      %1037 = vmatprep.subr.mxu0 0.0
      %1038 = vmatpush1.msra.mxu0 0.0
      %1039 = vmatprep.subr.mxu0 0.0
      %1040 = vmatpush1.msra.mxu0 0.0
      %1041 = vmatprep.subr.mxu0 0.0
      %1042 = vmatpush1.msra.mxu0 0.0
      %1043 = vmatprep.subr.mxu0 0.0
      %1044 = vmatpush1.msra.mxu0 0.0
      %1045 = vmatprep.subr.mxu0 0.0
      %1046 = vmatpush1.msra.mxu0 %v940
      %1047 = vmatprep.subr.mxu0 0.0
      %1048 = vmatpush1.msra.mxu0 %v939
      %1049 = vmatprep.subr.mxu0 0.0
      %1050 = vmatpush1.msra.mxu0 %v938
      %1051 = vmatprep.subr.mxu0 0.0
      %1052 = vmatpush1.msra.mxu0 %v937
      %1053 = vmatprep.subr.mxu0 0.0
      %1054 = vmatpush2.msra.mxu0 0.0
      %1055 = vmatprep.subr.mxu0 0.0
      %1056 = vmatpush2.msra.mxu0 0.0
      %1057 = vmatprep.subr.mxu0 0.0
      %1058 = vmatpush2.msra.mxu0 0.0
      %1059 = vmatprep.subr.mxu0 0.0
      %1060 = vmatpush2.msra.mxu0 0.0
      %1061 = vmatprep.subr.mxu0 0.0
      %1062 = vmatpush2.msra.mxu0 0.0
      %1063 = vmatprep.subr.mxu0 0.0
      %1064 = vmatpush2.msra.mxu0 0.0
      %1065 = vmatprep.subr.mxu0 0.0
      %1066 = vmatpush2.msra.mxu0 0.0
      %1067 = vmatprep.subr.mxu0 0.0
      %1068 = vmatpush2.msra.mxu0 0.0
      %1069 = vmatprep.subr.mxu0 0.0
      %1070 = vmatpush2.msra.mxu0 0.0
      %1071 = vmatprep.subr.mxu0 0.0
      %1072 = vmatpush2.msra.mxu0 0.0
      %1073 = vmatprep.subr.mxu0 0.0
      %1074 = vmatpush2.msra.mxu0 0.0
      %1075 = vmatprep.subr.mxu0 0.0
      %1076 = vmatpush2.msra.mxu0 0.0
      %1077 = vmatprep.subr.mxu0 0.0
      %1078 = vmatpush2.msra.mxu0 0.0
      %1079 = vmatprep.subr.mxu0 0.0
      %1080 = vmatpush2.msra.mxu0 0.0
      %1081 = vmatprep.subr.mxu0 0.0
      %1082 = vmatpush2.msra.mxu0 0.0
      %1083 = vmatprep.subr.mxu0 0.0
      %1084 = vmatpush2.msra.mxu0 0.0
      %1085 = vmatprep.mubr.f32.mxu0 0.0
      %1086 = vmatmul.mubr.f32.gmra.mxu0 %v1019
      %v1087 = vpop.f32.mrf.mxu0
      %v1088 = vadd.f32 %v1015, %v1087
      %v1089 = vpop.f32.mrf.mxu0
      %1090 = vdwg.mxu0
      %v1091 = vld [vmem:[%s8] sm:$0x1]
      %v1093 = vlaneseq
      %v1094 = vshrl.u32 %v1093, 7
      %v1095 = vsub.s32 0, %v1094
      %v1096 = vrot.slane %v1091, %v1095
      %v1098 = vadd.f32 %v1088, %v1096
      %1099 = vmax.xlane.f32.xlu0 %v1098
      %v1100 = vpop.xlane.xlu0 %1099
      %v1101 = vsub.f32 %v1098, %v1100
      %v1102 = vmul.f32 %v1101, 1.442695
      %v1103 = vpow.pop %v1102
      %1104 = vadd.xlane.f32.xlu0 %v1103
      %v1105 = vpop.xlane.xlu0 %1104
      %v1106 = vrcp.pop %v1105
      %v1107 = vmul.f32 %v1103, %v1106
      %1108 = vst [vmem:[#allocation10] sm:$0xff] %v1107
    $region57: #{tpu_custom_call.1} parent=1 // pred_fallthru
      _
    // Predicated region
    $region58: #{tpu_custom_call.1} parent=1 // pred_check
      _
    $region59: #{tpu_custom_call.1} parent=1 // pred_check_branch
      %1110 = sbr.rel (0) target = $region61
    $region60: #{tpu_custom_call.1} parent=1 // pred_region
      %s1112 = ssub.s32 128, 128
      %1113 = vsyncadd [#allocation6], %s1112
      %s1115 = sshll.u32 [#allocation10], 4
      %s1116 = int_to_ptr.vmem [resolvable:$true] %s1115
      %1118 = dma.vmem_to_hbm [thread:$0]  %s1116, 128, %s9, [#allocation6]
    $region61: #{tpu_custom_call.1} parent=1 // pred_fallthru
      _
    // Predicated region
    $region62: #{tpu_custom_call.1} parent=1 // pred_check
      _
    $region63: #{tpu_custom_call.1} parent=1 // pred_check_branch
      %1120 = sbr.rel (0) target = $region65
    $region64: #{tpu_custom_call.1} parent=1 // pred_region
      %1121 = dma.done [#allocation6], 128
    $region65: #{tpu_custom_call.1} parent=1 // pred_fallthru
      _
    %1122 = vsyncpa [#allocation5], 1
    %1123 = vsyncpa [#allocation8], 1
    %1124 = vsyncpa [#allocation6], 1

</llo_original>
